<compile_context>
chip_gen: v7x
topology: tpu7x:2x2x1
jax: 0.10.0
libtpu: 0.0.40
codegen_flags: <defaults>
</compile_context>

<pallas_src>
import jax
import jax.numpy as jnp
from jax import lax
from jax.experimental import pallas as pl
from jax.experimental.pallas import tpu as pltpu

_MAX_BLOCK_BYTES = 2 * 1024 * 1024   # per-block cap; ~8 MiB resident with double buffering
_MAX_LANE_TILE = 2048                # lane-dim tile cap (roofline saturates at ~512-1024)


def _frozen_bn_kernel(scale_ref, shift_ref, x_ref, o_ref):
    # scale/shift: (TM, 1) tiles broadcast along lanes; x/o: (TM, TN) lane-dense tiles.
    o_ref[...] = (x_ref[...] * scale_ref[...] + shift_ref[...]).astype(o_ref.dtype)


def _largest_tile(dim, unit, cap):
    """Largest multiple of `unit` that divides `dim` and is <= cap; else the full dim."""
    if dim % unit != 0 or unit > cap:
        return dim
    best = unit
    t = unit
    limit = min(dim, cap)
    while t <= limit:
        if dim % t == 0:
            best = t
        t += unit
    return best


def frozen_batch_norm_2d(x, weight, bias, running_mean, running_var, eps=1e-05):
    """x: (N, C, H, W). weight/bias/running_mean/running_var: (C,)."""
    N, C, H, W = x.shape
    rows, cols = N * C, H * W
    itemsize = jnp.dtype(x.dtype).itemsize

    # Precompute the per-channel affine once (f32), then expand to per-row tables for
    # the (N*C, H*W) view: row r = n*C + c  ->  channel is r % C, so tile scale N times.
    scale = weight.astype(jnp.float32) * lax.rsqrt(running_var.astype(jnp.float32) + eps)
    shift = bias.astype(jnp.float32) - running_mean.astype(jnp.float32) * scale
    scale_rows = jnp.tile(scale, N).reshape(rows, 1)
    shift_rows = jnp.tile(shift, N).reshape(rows, 1)

    x2d = x.reshape(rows, cols)

    # Lane (last-dim) tile: a multiple of 128 if possible, else the full dim (legal).
    tn = _largest_tile(cols, 128, _MAX_LANE_TILE)
    # Sublane (row) tile: multiple of the dtype's sublane quantum, capped by VMEM budget.
    sub_unit = 8 * max(1, 4 // itemsize)          # f32 -> 8, bf16 -> 16, int8 -> 32
    tm_cap = max(sub_unit, _MAX_BLOCK_BYTES // (tn * itemsize))
    tm = _largest_tile(rows, sub_unit, tm_cap)

    grid = (rows // tm, cols // tn)

    row_spec = pl.BlockSpec((tm, 1), lambda i, j: (i, 0))
    x_spec = pl.BlockSpec((tm, tn), lambda i, j: (i, j))
    o_spec = pl.BlockSpec((tm, tn), lambda i, j: (i, j))

    out2d = pl.pallas_call(
        _frozen_bn_kernel,
        out_shape=jax.ShapeDtypeStruct((rows, cols), x.dtype),
        grid=grid,
        in_specs=[row_spec, row_spec, x_spec],
        out_specs=o_spec,
        compiler_params=pltpu.CompilerParams(
            dimension_semantics=("parallel", "parallel")
        ),
    )(scale_rows, shift_rows, x2d)

    return out2d.reshape(N, C, H, W)


if __name__ == "__main__":
    key = jax.random.PRNGKey(0)
    N, C, H, W = 2, 4, 16, 16

    kx, kw, kb, km, kv = jax.random.split(key, 5)
    x = jax.random.normal(kx, (N, C, H, W), dtype=jnp.float32)

    # Deterministic "frozen" buffers. __init__ defaults are ones/zeros; perturb them
    # deterministically so the affine transform is non-trivial.
    weight = jnp.ones((C,), jnp.float32) + 0.1 * jax.random.normal(kw, (C,), jnp.float32)
    bias = 0.1 * jax.random.normal(kb, (C,), jnp.float32)
    running_mean = 0.1 * jax.random.normal(km, (C,), jnp.float32)
    running_var = jnp.ones((C,), jnp.float32) + 0.1 * jnp.abs(
        jax.random.normal(kv, (C,), jnp.float32)
    )

    out = frozen_batch_norm_2d(x, weight, bias, running_mean, running_var)
    out = jax.block_until_ready(out)

    # Reference (mirrors the PyTorch forward exactly).
    eps = 1e-05
    ref_scale = weight.reshape(1, -1, 1, 1) * lax.rsqrt(
        running_var.reshape(1, -1, 1, 1) + eps
    )
    ref_bias = bias.reshape(1, -1, 1, 1) - running_mean.reshape(1, -1, 1, 1) * ref_scale
    ref = x * ref_scale + ref_bias

    assert out.shape == x.shape and out.dtype == x.dtype
    assert jnp.allclose(out, ref, rtol=1e-5, atol=1e-5)
    print("KERNEL_OK")
</pallas_src>

<mosaic_0001>
module attributes {stable_mosaic.version = 11 : i64} {
  func.func @_frozen_bn_kernel(%arg0: i32, %arg1: i32, %arg2: memref<8x1xf32, #tpu.memory_space<vmem>>, %arg3: memref<8x1xf32, #tpu.memory_space<vmem>>, %arg4: memref<8x256xf32, #tpu.memory_space<vmem>>, %arg5: memref<8x256xf32, #tpu.memory_space<vmem>>) attributes {dimension_semantics = [#tpu.dimension_semantics<parallel>, #tpu.dimension_semantics<parallel>], iteration_bounds = array<i64: 1, 1>, scalar_prefetch = 0 : i64, scratch_operands = 0 : i64, tpu.core_type = #tpu.core_type<tc>, window_params = [{transform_indices = @transform_0, window_bounds = array<i64: 8, 1>}, {transform_indices = @transform_1, window_bounds = array<i64: 8, 1>}, {transform_indices = @transform_2, window_bounds = array<i64: 8, 256>}, {transform_indices = @transform_3, window_bounds = array<i64: 8, 256>}]} {
    %c0 = arith.constant 0 : index
    %c0_0 = arith.constant 0 : index
    %0 = vector.load %arg4[%c0, %c0_0] : memref<8x256xf32, #tpu.memory_space<vmem>>, vector<8x256xf32>
    %c0_1 = arith.constant 0 : index
    %c0_2 = arith.constant 0 : index
    %1 = vector.load %arg2[%c0_1, %c0_2] : memref<8x1xf32, #tpu.memory_space<vmem>>, vector<8x1xf32>
    %2 = vector.broadcast %1 : vector<8x1xf32> to vector<8x256xf32>
    %3 = arith.mulf %0, %2 : vector<8x256xf32>
    %c0_3 = arith.constant 0 : index
    %c0_4 = arith.constant 0 : index
    %4 = vector.load %arg3[%c0_3, %c0_4] : memref<8x1xf32, #tpu.memory_space<vmem>>, vector<8x1xf32>
    %5 = vector.broadcast %4 : vector<8x1xf32> to vector<8x256xf32>
    %6 = arith.addf %3, %5 : vector<8x256xf32>
    %c0_5 = arith.constant 0 : index
    %c0_6 = arith.constant 0 : index
    %7 = vector.load %arg5[%c0_5, %c0_6] : memref<8x256xf32, #tpu.memory_space<vmem>>, vector<8x256xf32>
    tpu.vector_store %arg5[%c0_5, %c0_6], %6 {strides = array<i32>} : memref<8x256xf32, #tpu.memory_space<vmem>>, vector<8x256xf32>,
    return
  }
  func.func @transform_0(%arg0: i32, %arg1: i32) -> (i32, i32) {
    %c0_i32 = arith.constant 0 : i32
    %c0_i32_0 = arith.constant 0 : i32
    return %arg0, %c0_i32 : i32, i32
  }
  func.func @transform_1(%arg0: i32, %arg1: i32) -> (i32, i32) {
    %c0_i32 = arith.constant 0 : i32
    %c0_i32_0 = arith.constant 0 : i32
    return %arg0, %c0_i32 : i32, i32
  }
  func.func @transform_2(%arg0: i32, %arg1: i32) -> (i32, i32) {
    %c0_i32 = arith.constant 0 : i32
    return %arg0, %arg1 : i32, i32
  }
  func.func @transform_3(%arg0: i32, %arg1: i32) -> (i32, i32) {
    %c0_i32 = arith.constant 0 : i32
    return %arg0, %arg1 : i32, i32
  }
}

</mosaic_0001>

<llo_original>
// kernel: tpu_custom_call.1
$region0: #{tpu_custom_call.1}
  #allocation0 [shape = 'u32[]', space=smem, size = 0x4, offset = 0x4, fixed_abs, tag = 'smem constant byte address 0x4 - core index']
  #allocation1 [shape = 'u32[144,128]{1,0:T(1,128)}', space=vmem, size = 0x12000, scoped, tag = 'internal scratch']
  %s0 = inlined_call_operand.vmem [shape: f32[8,1], index: 0, kind: input, shape index: {}]
  %s1 = inlined_call_operand.vmem [shape: f32[8,1], index: 1, kind: input, shape index: {}]
  %s2 = inlined_call_operand.vmem [shape: f32[8,256], index: 2, kind: input, shape index: {}]
  %s3 = inlined_call_operand.hbm [shape: f32[8,256], index: 3, kind: output, shape index: {}]
  %s4 = sld [smem:[#allocation0]]
  $region22: #{tpu_custom_call.1} parent=0
    _
  %s6 = ssub.s32 1, %s4
  %s7 = scalar_select 0, %s6, %s4
  $region1: #{tpu_custom_call.1} parent=0
    #allocation2 [shape = 'u8[8192]{0}', space=vmem, size = 0x2000, scoped, tag = 'output window, operand 0, single buffered']
    #allocation3 [shape = 's32[1]{0}', space=sflag, size = 0x4, scoped, tag = 'scoped memory for tpu_custom_call.1']
    %8 = vsyncpa [#allocation3], 0
    // Predicated region
    $region2: #{tpu_custom_call.1} parent=1 // pred_check
      _
    $region3: #{tpu_custom_call.1} parent=1 // pred_check_branch
      %10 = sbr.rel (0) target = $region5
    $region4: #{tpu_custom_call.1} parent=1 // pred_region
      _
    $region5: #{tpu_custom_call.1} parent=1 // pred_fallthru
      _
    // Predicated region
    $region6: #{tpu_custom_call.1} parent=1 // pred_check
      _
    $region7: #{tpu_custom_call.1} parent=1 // pred_check_branch
      %12 = sbr.rel (0) target = $region9
    $region8: #{tpu_custom_call.1} parent=1 // pred_region
      _
    $region9: #{tpu_custom_call.1} parent=1 // pred_fallthru
      _
    // Predicated region
    $region10: #{tpu_custom_call.1} parent=1 // pred_check
      _
    $region11: #{tpu_custom_call.1} parent=1 // pred_check_branch
      %14 = sbr.rel (0) target = $region13
    $region12: #{tpu_custom_call.1} parent=1 // pred_region
      _
    $region13: #{tpu_custom_call.1} parent=1 // pred_fallthru
      _
    %v15 = vld [vmem:[%s2] sm:$0xff]
    %v16 = vld [vmem:[%s2 + $0x8] sm:$0xff]
    %v17 = vld [vmem:[%s0] sm:$0xff]
    %19 = vset.pattern.permute.xlu0 0
    %20 = vperm.xlu0 %19, %v17
    %v21 = vpop.permute.xlu0 %20
    %v23 = vmul.f32 %v15, %v21
    %v24 = vmul.f32 %v16, %v21
    %v25 = vld [vmem:[%s1] sm:$0xff]
    %27 = vset.pattern.permute.xlu0 0
    %28 = vperm.xlu0 %27, %v25
    %v29 = vpop.permute.xlu0 %28
    %v31 = vadd.f32 %v23, %v29
    %v32 = vadd.f32 %v24, %v29
    %33 = vst [vmem:[#allocation2] sm:$0xff] %v31
    %34 = vst [vmem:[#allocation2 + $0x8] sm:$0xff] %v32
    // Predicated region
    $region14: #{tpu_custom_call.1} parent=1 // pred_check
      _
    $region15: #{tpu_custom_call.1} parent=1 // pred_check_branch
      %36 = sbr.rel (0) target = $region17
    $region16: #{tpu_custom_call.1} parent=1 // pred_region
      %s38 = ssub.s32 256, 256
      %39 = vsyncadd [#allocation3], %s38
      %s41 = sshll.u32 [#allocation2], 4
      %s42 = int_to_ptr.vmem [resolvable:$true] %s41
      %44 = dma.vmem_to_hbm [thread:$0]  %s42, 256, %s3, [#allocation3]
    $region17: #{tpu_custom_call.1} parent=1 // pred_fallthru
      _
    // Predicated region
    $region18: #{tpu_custom_call.1} parent=1 // pred_check
      _
    $region19: #{tpu_custom_call.1} parent=1 // pred_check_branch
      %46 = sbr.rel (0) target = $region21
    $region20: #{tpu_custom_call.1} parent=1 // pred_region
      %47 = dma.done [#allocation3], 256
    $region21: #{tpu_custom_call.1} parent=1 // pred_fallthru
      _
    %48 = vsyncpa [#allocation3], 1

</llo_original>
